<compile_context>
chip_gen: v7x
topology: tpu7x:2x2x1
jax: 0.10.0
libtpu: 0.0.40
codegen_flags: <defaults>
</compile_context>

<pallas_src>
import jax
import jax.numpy as jnp
from jax.experimental import pallas as pl
from jax.experimental.pallas import tpu as pltpu


def _make_pooling_kernel(pool_size, H, W):
    pad = pool_size // 2

    def kernel(x_ref, o_ref):
        # x_ref / o_ref: [tc, H, W]
        x = x_ref[...].astype(jnp.float32)
        tc = x.shape[0]

        # --- separable zero-padded box sum (numerator) ---
        # rows: sum over offsets -pad..+pad along H (zeros outside the image)
        zh = jnp.zeros((tc, pad, W), jnp.float32)
        xh = jnp.concatenate([zh, x, zh], axis=1)          # [tc, H+2p, W]
        s = xh[:, 0:H, :]
        for d in range(1, pool_size):
            s = s + xh[:, d:d + H, :]
        # cols: sum over offsets -pad..+pad along W
        zw = jnp.zeros((tc, H, pad), jnp.float32)
        sw = jnp.concatenate([zw, s, zw], axis=2)          # [tc, H, W+2p]
        s = sw[:, :, 0:W]
        for d in range(1, pool_size):
            s = s + sw[:, :, d:d + W]

        # --- valid-element count per (i, j)  (count_include_pad=False) ---
        ri = jax.lax.broadcasted_iota(jnp.int32, (1, H, W), 1)
        ci = jax.lax.broadcasted_iota(jnp.int32, (1, H, W), 2)
        cnt_h = jnp.minimum(ri + pad, H - 1) - jnp.maximum(ri - pad, 0) + 1
        cnt_w = jnp.minimum(ci + pad, W - 1) - jnp.maximum(ci - pad, 0) + 1
        cnt = (cnt_h * cnt_w).astype(jnp.float32)

        # pool(x) - x
        o_ref[...] = (s / cnt - x).astype(o_ref.dtype)

    return kernel


def _pick_tile(BC, H, W, itemsize):
    """Largest divisor of BC that keeps one input block <= ~2 MiB and leaves
    >= 2 grid steps (when possible) for megacore sharding / pipelining."""
    vmem_budget = 2 * 1024 * 1024
    cap = max(1, vmem_budget // (H * W * itemsize))
    cap = min(cap, BC)
    if BC >= 2:
        cap = min(cap, max(1, BC // 2))
    tc = 1
    for d in range(1, int(cap) + 1):
        if BC % d == 0:
            tc = d
    return tc


def pooling_forward(x_nchw, pool_size=3):
    """Pooling.forward: AvgPool2d(k, stride=1, pad=k//2, count_include_pad=False)(x) - x."""
    assert pool_size % 2 == 1, "odd pool_size expected (stride=1, pad=k//2 keeps spatial size)"
    B, C, H, W = x_nchw.shape
    BC = B * C
    x2 = x_nchw.reshape(BC, H, W)                 # free reshape, no transpose
    itemsize = x2.dtype.itemsize

    tc = _pick_tile(BC, H, W, itemsize)
    grid = (BC // tc,)

    kernel = _make_pooling_kernel(pool_size, H, W)
    out = pl.pallas_call(
        kernel,
        out_shape=jax.ShapeDtypeStruct((BC, H, W), x2.dtype),
        grid_spec=pltpu.PrefetchScalarGridSpec(
            num_scalar_prefetch=0,
            grid=grid,
            in_specs=[pl.BlockSpec((tc, H, W), lambda i: (i, 0, 0))],
            out_specs=pl.BlockSpec((tc, H, W), lambda i: (i, 0, 0)),
        ),
        compiler_params=pltpu.CompilerParams(
            dimension_semantics=("parallel",),
        ),
        cost_estimate=pl.CostEstimate(
            flops=2 * pool_size * BC * H * W,
            transcendentals=0,
            bytes_accessed=2 * BC * H * W * itemsize,
        ),
    )(x2)
    return out.reshape(B, C, H, W)


if __name__ == "__main__":
    # Small shapes consistent with the module (scaled down from 1x1x512x512).
    B, C, H, W = 2, 4, 16, 16
    pool_size = 3

    key = jax.random.PRNGKey(0)
    x = jax.random.normal(key, (B, C, H, W), dtype=jnp.float32)

    out = jax.block_until_ready(pooling_forward(x, pool_size))

    # Reference: AvgPool2d(stride=1, pad=k//2, count_include_pad=False)(x) - x
    pad = pool_size // 2
    pad_cfg = ((0, 0), (0, 0), (pad, pad), (pad, pad))
    s_ref = jax.lax.reduce_window(
        x, 0.0, jax.lax.add,
        (1, 1, pool_size, pool_size), (1, 1, 1, 1), pad_cfg)
    c_ref = jax.lax.reduce_window(
        jnp.ones_like(x), 0.0, jax.lax.add,
        (1, 1, pool_size, pool_size), (1, 1, 1, 1), pad_cfg)
    ref = s_ref / c_ref - x
    ref = jax.block_until_ready(ref)

    assert out.shape == (B, C, H, W)
    assert jnp.allclose(out, ref, atol=1e-5, rtol=1e-5)

    print("KERNEL_OK")
</pallas_src>

<mosaic_0001>
module attributes {stable_mosaic.version = 11 : i64} {
  func.func @kernel(%arg0: i32, %arg1: memref<4x16x16xf32, #tpu.memory_space<vmem>>, %arg2: memref<4x16x16xf32, #tpu.memory_space<vmem>>) attributes {dimension_semantics = [#tpu.dimension_semantics<parallel>], iteration_bounds = array<i64: 2>, scalar_prefetch = 0 : i64, scratch_operands = 0 : i64, tpu.core_type = #tpu.core_type<tc>, window_params = [{transform_indices = @transform_0, window_bounds = array<i64: 4, 16, 16>}, {transform_indices = @transform_1, window_bounds = array<i64: 4, 16, 16>}]} {
    %c0 = arith.constant 0 : index
    %c0_0 = arith.constant 0 : index
    %c0_1 = arith.constant 0 : index
    %0 = vector.load %arg1[%c0, %c0_0, %c0_1] : memref<4x16x16xf32, #tpu.memory_space<vmem>>, vector<4x16x16xf32>
    %cst = arith.constant 0.000000e+00 : f32
    %1 = vector.broadcast %cst : f32 to vector<4x1x16xf32>
    %2 = tpu.concatenate %1, %0, %1 in 1 : vector<4x1x16xf32>, vector<4x16x16xf32>, vector<4x1x16xf32> -> vector<4x18x16xf32>
    %3 = vector.extract_strided_slice %2 {offsets = [0, 0, 0], sizes = [4, 16, 16], strides = [1, 1, 1]} : vector<4x18x16xf32> to vector<4x16x16xf32>
    %4 = vector.extract_strided_slice %2 {offsets = [0, 1, 0], sizes = [4, 16, 16], strides = [1, 1, 1]} : vector<4x18x16xf32> to vector<4x16x16xf32>
    %5 = arith.addf %3, %4 : vector<4x16x16xf32>
    %6 = vector.extract_strided_slice %2 {offsets = [0, 2, 0], sizes = [4, 16, 16], strides = [1, 1, 1]} : vector<4x18x16xf32> to vector<4x16x16xf32>
    %7 = arith.addf %5, %6 : vector<4x16x16xf32>
    %cst_2 = arith.constant 0.000000e+00 : f32
    %8 = vector.broadcast %cst_2 : f32 to vector<4x16x1xf32>
    %9 = tpu.concatenate %8, %7, %8 in 2 : vector<4x16x1xf32>, vector<4x16x16xf32>, vector<4x16x1xf32> -> vector<4x16x18xf32>
    %10 = vector.extract_strided_slice %9 {offsets = [0, 0, 0], sizes = [4, 16, 16], strides = [1, 1, 1]} : vector<4x16x18xf32> to vector<4x16x16xf32>
    %11 = vector.extract_strided_slice %9 {offsets = [0, 0, 1], sizes = [4, 16, 16], strides = [1, 1, 1]} : vector<4x16x18xf32> to vector<4x16x16xf32>
    %12 = arith.addf %10, %11 : vector<4x16x16xf32>
    %13 = vector.extract_strided_slice %9 {offsets = [0, 0, 2], sizes = [4, 16, 16], strides = [1, 1, 1]} : vector<4x16x18xf32> to vector<4x16x16xf32>
    %14 = arith.addf %12, %13 : vector<4x16x16xf32>
    %15 = tpu.iota {dimensions = array<i32: 1>} : vector<1x16x16xi32>
    %16 = tpu.iota {dimensions = array<i32: 2>} : vector<1x16x16xi32>
    %c1_i32 = arith.constant 1 : i32
    %17 = vector.broadcast %c1_i32 : i32 to vector<1x16x16xi32>
    %18 = arith.addi %15, %17 : vector<1x16x16xi32>
    %c15_i32 = arith.constant 15 : i32
    %19 = vector.broadcast %c15_i32 : i32 to vector<1x16x16xi32>
    %20 = arith.minsi %18, %19 : vector<1x16x16xi32>
    %c1_i32_3 = arith.constant 1 : i32
    %21 = vector.broadcast %c1_i32_3 : i32 to vector<1x16x16xi32>
    %22 = arith.subi %15, %21 : vector<1x16x16xi32>
    %c0_i32 = arith.constant 0 : i32
    %23 = vector.broadcast %c0_i32 : i32 to vector<1x16x16xi32>
    %24 = arith.maxsi %22, %23 : vector<1x16x16xi32>
    %25 = arith.subi %20, %24 : vector<1x16x16xi32>
    %c1_i32_4 = arith.constant 1 : i32
    %26 = vector.broadcast %c1_i32_4 : i32 to vector<1x16x16xi32>
    %27 = arith.addi %25, %26 : vector<1x16x16xi32>
    %c1_i32_5 = arith.constant 1 : i32
    %28 = vector.broadcast %c1_i32_5 : i32 to vector<1x16x16xi32>
    %29 = arith.addi %16, %28 : vector<1x16x16xi32>
    %c15_i32_6 = arith.constant 15 : i32
    %30 = vector.broadcast %c15_i32_6 : i32 to vector<1x16x16xi32>
    %31 = arith.minsi %29, %30 : vector<1x16x16xi32>
    %c1_i32_7 = arith.constant 1 : i32
    %32 = vector.broadcast %c1_i32_7 : i32 to vector<1x16x16xi32>
    %33 = arith.subi %16, %32 : vector<1x16x16xi32>
    %c0_i32_8 = arith.constant 0 : i32
    %34 = vector.broadcast %c0_i32_8 : i32 to vector<1x16x16xi32>
    %35 = arith.maxsi %33, %34 : vector<1x16x16xi32>
    %36 = arith.subi %31, %35 : vector<1x16x16xi32>
    %c1_i32_9 = arith.constant 1 : i32
    %37 = vector.broadcast %c1_i32_9 : i32 to vector<1x16x16xi32>
    %38 = arith.addi %36, %37 : vector<1x16x16xi32>
    %39 = arith.muli %27, %38 : vector<1x16x16xi32>
    %40 = arith.sitofp %39 : vector<1x16x16xi32> to vector<1x16x16xf32>
    %41 = vector.broadcast %40 : vector<1x16x16xf32> to vector<4x16x16xf32>
    %42 = arith.divf %14, %41 : vector<4x16x16xf32>
    %43 = arith.subf %42, %0 : vector<4x16x16xf32>
    %c0_10 = arith.constant 0 : index
    %c0_11 = arith.constant 0 : index
    %c0_12 = arith.constant 0 : index
    %44 = vector.load %arg2[%c0_10, %c0_11, %c0_12] : memref<4x16x16xf32, #tpu.memory_space<vmem>>, vector<4x16x16xf32>
    tpu.vector_store %arg2[%c0_10, %c0_11, %c0_12], %43 {strides = array<i32>} : memref<4x16x16xf32, #tpu.memory_space<vmem>>, vector<4x16x16xf32>,
    return
  }
  func.func @transform_0(%arg0: i32) -> (i32, i32, i32) {
    %c0_i32 = arith.constant 0 : i32
    %c0_i32_0 = arith.constant 0 : i32
    %c0_i32_1 = arith.constant 0 : i32
    return %arg0, %c0_i32, %c0_i32_0 : i32, i32, i32
  }
  func.func @transform_1(%arg0: i32) -> (i32, i32, i32) {
    %c0_i32 = arith.constant 0 : i32
    %c0_i32_0 = arith.constant 0 : i32
    %c0_i32_1 = arith.constant 0 : i32
    return %arg0, %c0_i32, %c0_i32_0 : i32, i32, i32
  }
}

</mosaic_0001>

<llo_original>
// kernel: tpu_custom_call.1
$region0: #{tpu_custom_call.1}
  #allocation0 [shape = 'u32[]', space=smem, size = 0x4, offset = 0x4, fixed_abs, tag = 'smem constant byte address 0x4 - core index']
  #allocation1 [shape = 'u32[144,128]{1,0:T(1,128)}', space=vmem, size = 0x12000, scoped, tag = 'internal scratch']
  %s0 = inlined_call_operand.hbm [shape: f32[8,16,16], index: 0, kind: input, shape index: {}]
  %s1 = inlined_call_operand.hbm [shape: f32[8,16,16], index: 1, kind: output, shape index: {}]
  %s2 = sld [smem:[#allocation0]]
  $region41: #{tpu_custom_call.1} parent=0
    _
  %s4 = ssub.s32 1, %s2
  %s5 = scalar_select 0, %s4, %s2
  $region1: #{tpu_custom_call.1} parent=0
    #allocation2 [shape = 'u8[65536]{0}', space=vmem, size = 0x10000, scoped, tag = 'input window, operand 0']
    #allocation3 [shape = 's32[2]{0}', space=sflag, size = 0x8, scoped, tag = 'scoped memory for tpu_custom_call.1']
    #allocation4 [shape = 's32[2]{0}', space=sflag, size = 0x8, scoped, tag = 'scoped memory for tpu_custom_call.1']
    #allocation5 [shape = 'u8[65536]{0}', space=vmem, size = 0x10000, scoped, tag = 'output window, operand 0']
    %6 = vsyncpa [#allocation3], 0
    %s7 = scalar_lea.sflag [#allocation3], 1
    %8 = vsyncpa %s7, 0
    %9 = vsyncpa [#allocation4], 0
    %s10 = scalar_lea.sflag [#allocation4], 1
    %11 = vsyncpa %s10, 0
    loop: start=0, step=1, limit=4
    $region2: #{tpu_custom_call.1} parent=1 // loop_pre_header
      _
    $region3: #{tpu_custom_call.1} parent=1 // loop_header
      %s13 = sphi 0, %s17
      %p14 = scmp.ge.s32.totalorder %s13, 4
      %s23 = sphi 0, %s25
      %s26 = sphi 0, %s23
      %s27 = sphi 0, %s26
      %s43 = sphi 0, %s27
      %s49 = sphi 0, %s51
      %s52 = sphi 0, %s49
      %s53 = sphi 0, %s52
      %s69 = sphi 0, %s53
    $region4: #{tpu_custom_call.1} parent=1 // loop_header_branch
      %16 = sbr.rel (%p14) target = $region8
    $region5: #{tpu_custom_call.1} parent=1 // loop_body
      %s18 = ssub.s32 %s13, 1
      %s19 = ssub.s32 %s13, 2
      %s20 = sadd.s32 %s13, 1
      %s21 = ssub.s32 %s13, %s20
      %p22 = scmp.eq.s32.totalorder %s21, 0
      %s24 = sadd.s32 %s23, 1
      %s25 = scalar_select %p22, %s23, %s24
      %p28 = pneg %p22
      %p29 = scmp.eq.s32.totalorder %s13, 1
      %p30 = por %p28, %p29
      %p31 = scmp.ne.s32.totalorder %s23, %s26
      %p32 = scmp.eq.s32.totalorder %s13, 0
      %p33 = por %p31, %p32
      %p34 = scmp.ne.s32.totalorder %s23, %s26
      %p35 = scmp.eq.s32.totalorder %s18, 1
      %p36 = por %p34, %p35
      %p37 = scmp.ne.s32.totalorder %s26, %s27
      %p38 = scmp.eq.s32.totalorder %s18, 0
      %p39 = por %p37, %p38
      %p40 = scmp.ne.s32.totalorder %s26, %s27
      %p41 = scmp.eq.s32.totalorder %s19, 1
      %p42 = por %p40, %p41
      %p44 = scmp.ne.s32.totalorder %s27, %s43
      %p45 = scmp.eq.s32.totalorder %s19, 0
      %p46 = por %p44, %p45
      %s47 = ssub.s32 %s13, %s20
      %p48 = scmp.eq.s32.totalorder %s47, 0
      %s50 = sadd.s32 %s49, 1
      %s51 = scalar_select %p48, %s49, %s50
      %p54 = pneg %p48
      %p55 = scmp.eq.s32.totalorder %s13, 1
      %p56 = por %p54, %p55
      %p57 = scmp.ne.s32.totalorder %s49, %s52
      %p58 = scmp.eq.s32.totalorder %s13, 0
      %p59 = por %p57, %p58
      %p60 = scmp.ne.s32.totalorder %s49, %s52
      %p61 = scmp.eq.s32.totalorder %s18, 1
      %p62 = por %p60, %p61
      %p63 = scmp.ne.s32.totalorder %s52, %s53
      %p64 = scmp.eq.s32.totalorder %s18, 0
      %p65 = por %p63, %p64
      %p66 = scmp.ne.s32.totalorder %s52, %s53
      %p67 = scmp.eq.s32.totalorder %s19, 1
      %p68 = por %p66, %p67
      %p70 = scmp.ne.s32.totalorder %s53, %s69
      %p71 = scmp.eq.s32.totalorder %s19, 0
      %p72 = por %p70, %p71
      %p73 = scmp.le.s32.totalorder 1, %s13
      %p74 = scmp.lt.s32.totalorder %s13, 3
      %p75 = pnand %p73, %p74
      %p76 = pneg %p75
      // Predicated region
      $region9: #{tpu_custom_call.1} parent=5 // pred_check
        _
      $region10: #{tpu_custom_call.1} parent=5 // pred_check_branch
        %78 = sbr.rel (%p75) target = $region12
      $region11: #{tpu_custom_call.1} parent=5 // pred_region
        %s79 = ssub.s32 %s13, 1
      $region12: #{tpu_custom_call.1} parent=5 // pred_fallthru
        _
      %p80 = scmp.lt.s32.totalorder %s13, 2
      // Predicated region
      $region13: #{tpu_custom_call.1} parent=5 // pred_check
        %p81 = pneg %p80
      $region14: #{tpu_custom_call.1} parent=5 // pred_check_branch
        %83 = sbr.rel (%p81) target = $region16
      $region15: #{tpu_custom_call.1} parent=5 // pred_region
        // Predicated region
        $region17: #{tpu_custom_call.1} parent=15 // pred_check
          %p84 = pneg %p33
        $region18: #{tpu_custom_call.1} parent=15 // pred_check_branch
          %86 = sbr.rel (%p84) target = $region20
        $region19: #{tpu_custom_call.1} parent=15 // pred_region
          %s87 = sand.u32 %s23, 1
          %s88 = scalar_lea.sflag [#allocation3], %s87
          %s89 = sand.u32 %s23, 1
          %s90 = smul.addr %s89, 64
          %s91 = scalar_lea.vmem [#allocation2], %s90
          %s92 = smul.u32 4, %s13
          %s94 = ssub.s32 1024, 1024
          %95 = vsyncadd %s88, %s94
          %s96 = smul.addr %s92, 2
          %s97 = smul.addr %s96, 128
          %s98 = scalar_lea.hbm %s0, %s97
          %s99 = sshll.u32 %s91, 4
          %s100 = int_to_ptr.vmem [resolvable:$true] %s99
          %105 = dma.hbm_to_vmem [thread:$0]  %s98, 1024, %s100, %s88, 128, 128, 8
        $region20: #{tpu_custom_call.1} parent=15 // pred_fallthru
          _
      $region16: #{tpu_custom_call.1} parent=5 // pred_fallthru
        _
      %p106 = scmp.le.s32.totalorder 1, %s13
      %p107 = scmp.lt.s32.totalorder %s13, 3
      %p108 = pnand %p106, %p107
      %p109 = pneg %p108
      // Predicated region
      $region21: #{tpu_custom_call.1} parent=5 // pred_check
        _
      $region22: #{tpu_custom_call.1} parent=5 // pred_check_branch
        %111 = sbr.rel (%p108) target = $region24
      $region23: #{tpu_custom_call.1} parent=5 // pred_region
        %s112 = ssub.s32 %s13, 1
        %s113 = sand.u32 %s26, 1
        %s114 = scalar_lea.sflag [#allocation3], %s113
        %s115 = sand.u32 %s26, 1
        %s116 = smul.addr %s115, 64
        %s117 = scalar_lea.vmem [#allocation2], %s116
        // Predicated region
        $region25: #{tpu_custom_call.1} parent=23 // pred_check
          %p118 = pneg %p39
        $region26: #{tpu_custom_call.1} parent=23 // pred_check_branch
          %120 = sbr.rel (%p118) target = $region28
        $region27: #{tpu_custom_call.1} parent=23 // pred_region
          %121 = dma.done %s114, 1024
        $region28: #{tpu_custom_call.1} parent=23 // pred_fallthru
          _
        %s122 = sand.u32 %s26, 1
        %s123 = scalar_lea.sflag [#allocation3], %s122
        %s124 = sand.u32 %s26, 1
        %s125 = smul.addr %s124, 64
        %s126 = scalar_lea.vmem [#allocation2], %s125
        %p127 = pneg %p39
        %p128 = pneg %p36
        %p129 = pneg %p65
        %p130 = pneg %p62
        %s131 = sand.u32 %s52, 1
        %s132 = scalar_lea.sflag [#allocation4], %s131
        %s133 = sand.u32 %s52, 1
        %s134 = smul.addr %s133, 64
        %s135 = scalar_lea.vmem [#allocation5], %s134
        %s136 = smul.u32 4, %s18
        %s137 = smul.u32 4, %s18
        %v138 = vld [vmem:[%s117] sm:$0xff]
        %v139 = vld [vmem:[%s117 + $0x8] sm:$0xff]
        %v140 = vld [vmem:[%s117 + $0x10] sm:$0xff]
        %v141 = vld [vmem:[%s117 + $0x18] sm:$0xff]
        %v142 = vld [vmem:[%s117 + $0x20] sm:$0xff]
        %v143 = vld [vmem:[%s117 + $0x28] sm:$0xff]
        %v144 = vld [vmem:[%s117 + $0x30] sm:$0xff]
        %v145 = vld [vmem:[%s117 + $0x38] sm:$0xff]
        %vm154 = vcmask 1040384
        %v155 = vrot.slane %v138, 7
        %v156 = vrot.slane %v139, 7
        %v157 = vsel %vm154, %v155, %v156
        %v158 = vrot.slane %v140, 7
        %v159 = vrot.slane %v141, 7
        %v160 = vsel %vm154, %v158, %v159
        %v161 = vrot.slane %v142, 7
        %v162 = vrot.slane %v143, 7
        %v163 = vsel %vm154, %v161, %v162
        %v164 = vrot.slane %v144, 7
        %v165 = vrot.slane %v145, 7
        %v166 = vsel %vm154, %v164, %v165
        %v179 = vsel %vm154, 0.0, %v155
        %v180 = vsel %vm154, 0.0, %v158
        %v181 = vsel %vm154, 0.0, %v161
        %v182 = vsel %vm154, 0.0, %v164
        %v183 = vsel %vm154, %v156, 0.0
        %v184 = vsel %vm154, %v159, 0.0
        %v185 = vsel %vm154, %v162, 0.0
        %v186 = vsel %vm154, %v165, 0.0
        %vm195 = vcmask 1046528
        %v196 = vrot.slane %v179, 1
        %v197 = vrot.slane %v157, 1
        %v198 = vsel %vm195, %v196, %v197
        %v199 = vrot.slane %v183, 1
        %v200 = vsel %vm195, %v197, %v199
        %v201 = vrot.slane %v180, 1
        %v202 = vrot.slane %v160, 1
        %v203 = vsel %vm195, %v201, %v202
        %v204 = vrot.slane %v184, 1
        %v205 = vsel %vm195, %v202, %v204
        %v206 = vrot.slane %v181, 1
        %v207 = vrot.slane %v163, 1
        %v208 = vsel %vm195, %v206, %v207
        %v209 = vrot.slane %v185, 1
        %v210 = vsel %vm195, %v207, %v209
        %v211 = vrot.slane %v182, 1
        %v212 = vrot.slane %v166, 1
        %v213 = vsel %vm195, %v211, %v212
        %v214 = vrot.slane %v186, 1
        %v215 = vsel %vm195, %v212, %v214
        %v224 = vadd.f32 %v179, %v198
        %v225 = vadd.f32 %v157, %v200
        %v226 = vadd.f32 %v180, %v203
        %v227 = vadd.f32 %v160, %v205
        %v228 = vadd.f32 %v181, %v208
        %v229 = vadd.f32 %v163, %v210
        %v230 = vadd.f32 %v182, %v213
        %v231 = vadd.f32 %v166, %v215
        %vm232 = vcmask 1045504
        %v233 = vrot.slane %v179, 2
        %v234 = vrot.slane %v157, 2
        %v235 = vsel %vm232, %v233, %v234
        %v236 = vrot.slane %v183, 2
        %v237 = vsel %vm232, %v234, %v236
        %v238 = vrot.slane %v180, 2
        %v239 = vrot.slane %v160, 2
        %v240 = vsel %vm232, %v238, %v239
        %v241 = vrot.slane %v184, 2
        %v242 = vsel %vm232, %v239, %v241
        %v243 = vrot.slane %v181, 2
        %v244 = vrot.slane %v163, 2
        %v245 = vsel %vm232, %v243, %v244
        %v246 = vrot.slane %v185, 2
        %v247 = vsel %vm232, %v244, %v246
        %v248 = vrot.slane %v182, 2
        %v249 = vrot.slane %v166, 2
        %v250 = vsel %vm232, %v248, %v249
        %v251 = vrot.slane %v186, 2
        %v252 = vsel %vm232, %v249, %v251
        %v261 = vadd.f32 %v224, %v235
        %v262 = vadd.f32 %v225, %v237
        %v263 = vadd.f32 %v226, %v240
        %v264 = vadd.f32 %v227, %v242
        %v265 = vadd.f32 %v228, %v245
        %v266 = vadd.f32 %v229, %v247
        %v267 = vadd.f32 %v230, %v250
        %v268 = vadd.f32 %v231, %v252
        %277 = vrot.lane.b32.xlu0 %v261, 1
        %v278 = vpop.permute.xlu0 %277
        %279 = vrot.lane.b32.xlu0 %v262, 1
        %v280 = vpop.permute.xlu0 %279
        %281 = vrot.lane.b32.xlu0 %v263, 1
        %v282 = vpop.permute.xlu0 %281
        %283 = vrot.lane.b32.xlu0 %v264, 1
        %v284 = vpop.permute.xlu0 %283
        %285 = vrot.lane.b32.xlu0 %v265, 1
        %v286 = vpop.permute.xlu0 %285
        %287 = vrot.lane.b32.xlu0 %v266, 1
        %v288 = vpop.permute.xlu0 %287
        %289 = vrot.lane.b32.xlu0 %v267, 1
        %v290 = vpop.permute.xlu0 %289
        %291 = vrot.lane.b32.xlu0 %v268, 1
        %v292 = vpop.permute.xlu0 %291
        %vm301 = vcmask 7168
        %v302 = vsel %vm301, 0.0, %v278
        %v303 = vsel %vm301, 0.0, %v280
        %v304 = vsel %vm301, 0.0, %v282
        %v305 = vsel %vm301, 0.0, %v284
        %v306 = vsel %vm301, 0.0, %v286
        %v307 = vsel %vm301, 0.0, %v288
        %v308 = vsel %vm301, 0.0, %v290
        %v309 = vsel %vm301, 0.0, %v292
        %vm310 = vcmask 138240
        %v311 = vsel %vm310, %v302, 0.0
        %v312 = vsel %vm310, %v303, 0.0
        %v313 = vsel %vm310, %v304, 0.0
        %v314 = vsel %vm310, %v305, 0.0
        %v315 = vsel %vm310, %v306, 0.0
        %v316 = vsel %vm310, %v307, 0.0
        %v317 = vsel %vm310, %v308, 0.0
        %v318 = vsel %vm310, %v309, 0.0
        %327 = vrot.lane.b32.xlu0 %v311, 127
        %v328 = vpop.permute.xlu0 %327
        %329 = vrot.lane.b32.xlu0 %v312, 127
        %v330 = vpop.permute.xlu0 %329
        %331 = vrot.lane.b32.xlu0 %v313, 127
        %v332 = vpop.permute.xlu0 %331
        %333 = vrot.lane.b32.xlu0 %v314, 127
        %v334 = vpop.permute.xlu0 %333
        %335 = vrot.lane.b32.xlu0 %v315, 127
        %v336 = vpop.permute.xlu0 %335
        %337 = vrot.lane.b32.xlu0 %v316, 127
        %v338 = vpop.permute.xlu0 %337
        %339 = vrot.lane.b32.xlu0 %v317, 127
        %v340 = vpop.permute.xlu0 %339
        %341 = vrot.lane.b32.xlu0 %v318, 127
        %v342 = vpop.permute.xlu0 %341
        %v351 = vadd.f32 %v311, %v328
        %v352 = vadd.f32 %v312, %v330
        %v353 = vadd.f32 %v313, %v332
        %v354 = vadd.f32 %v314, %v334
        %v355 = vadd.f32 %v315, %v336
        %v356 = vadd.f32 %v316, %v338
        %v357 = vadd.f32 %v317, %v340
        %v358 = vadd.f32 %v318, %v342
        %359 = vrot.lane.b32.xlu0 %v311, 126
        %v360 = vpop.permute.xlu0 %359
        %361 = vrot.lane.b32.xlu0 %v312, 126
        %v362 = vpop.permute.xlu0 %361
        %363 = vrot.lane.b32.xlu0 %v313, 126
        %v364 = vpop.permute.xlu0 %363
        %365 = vrot.lane.b32.xlu0 %v314, 126
        %v366 = vpop.permute.xlu0 %365
        %367 = vrot.lane.b32.xlu0 %v315, 126
        %v368 = vpop.permute.xlu0 %367
        %369 = vrot.lane.b32.xlu0 %v316, 126
        %v370 = vpop.permute.xlu0 %369
        %371 = vrot.lane.b32.xlu0 %v317, 126
        %v372 = vpop.permute.xlu0 %371
        %373 = vrot.lane.b32.xlu0 %v318, 126
        %v374 = vpop.permute.xlu0 %373
        %v383 = vadd.f32 %v351, %v360
        %v384 = vadd.f32 %v352, %v362
        %v385 = vadd.f32 %v353, %v364
        %v386 = vadd.f32 %v354, %v366
        %v387 = vadd.f32 %v355, %v368
        %v388 = vadd.f32 %v356, %v370
        %v389 = vadd.f32 %v357, %v372
        %v390 = vadd.f32 %v358, %v374
        %v391 = vlaneseq
        %v392 = vshrl.u32 %v391, 7
        %v393 = vadd.s32 %v392, 8
        %v394 = vlaneseq
        %v395 = vand.u32 %v394, 127
        %v396 = vadd.s32 %v392, 1
        %v397 = vadd.s32 %v393, 1
        %vm398 = vcmp.lt.s32.totalorder %v396, 15
        %v399 = vsel %vm398, %v396, 15
        %vm400 = vcmp.lt.s32.totalorder %v397, 15
        %v401 = vsel %vm400, %v397, 15
        %v402 = vsub.s32 %v392, 1
        %v403 = vsub.s32 %v393, 1
        %vm404 = vcmp.gt.s32.totalorder %v402, 0
        %v405 = vsel %vm404, %v402, 0
        %vm406 = vcmp.gt.s32.totalorder %v403, 0
        %v407 = vsel %vm406, %v403, 0
        %v408 = vsub.s32 %v399, %v405
        %v409 = vsub.s32 %v401, %v407
        %v410 = vadd.s32 %v408, 1
        %v411 = vadd.s32 %v409, 1
        %v412 = vadd.s32 %v395, 1
        %vm413 = vcmp.lt.s32.totalorder %v412, 15
        %v414 = vsel %vm413, %v412, 15
        %v415 = vsub.s32 %v395, 1
        %vm416 = vcmp.gt.s32.totalorder %v415, 0
        %v417 = vsel %vm416, %v415, 0
        %v418 = vsub.s32 %v414, %v417
        %v419 = vadd.s32 %v418, 1
        %v420 = vmul.u32 %v410, %v419
        %v421 = vmul.u32 %v411, %v419
        %v422 = vcvt.s32.f32 %v420
        %v423 = vcvt.s32.f32 %v421
        %v424 = vrcp.pop %v422
        %v425 = vmul.f32 %v383, %v424
        %v426 = vrcp.pop %v423
        %v427 = vmul.f32 %v384, %v426
        %v428 = vmul.f32 %v385, %v424
        %v429 = vmul.f32 %v386, %v426
        %v430 = vmul.f32 %v387, %v424
        %v431 = vmul.f32 %v388, %v426
        %v432 = vmul.f32 %v389, %v424
        %v433 = vmul.f32 %v390, %v426
        %v434 = vsub.f32 %v425, %v138
        %v435 = vsub.f32 %v427, %v139
        %v436 = vsub.f32 %v428, %v140
        %v437 = vsub.f32 %v429, %v141
        %v438 = vsub.f32 %v430, %v142
        %v439 = vsub.f32 %v431, %v143
        %v440 = vsub.f32 %v432, %v144
        %v441 = vsub.f32 %v433, %v145
        %vm442 = vcmask 130048
        %443 = vst.msk [vmem:[%s135] sm:$0xff] %vm442, %v434
        %444 = vst.msk [vmem:[%s135 + $0x8] sm:$0xff] %vm442, %v435
        %445 = vst.msk [vmem:[%s135 + $0x10] sm:$0xff] %vm442, %v436
        %446 = vst.msk [vmem:[%s135 + $0x18] sm:$0xff] %vm442, %v437
        %447 = vst.msk [vmem:[%s135 + $0x20] sm:$0xff] %vm442, %v438
        %448 = vst.msk [vmem:[%s135 + $0x28] sm:$0xff] %vm442, %v439
        %449 = vst.msk [vmem:[%s135 + $0x30] sm:$0xff] %vm442, %v440
        %450 = vst.msk [vmem:[%s135 + $0x38] sm:$0xff] %vm442, %v441
        %s451 = sand.u32 %s52, 1
        %s452 = scalar_lea.sflag [#allocation4], %s451
        %s453 = sand.u32 %s52, 1
        %s454 = smul.addr %s453, 64
        %s455 = scalar_lea.vmem [#allocation5], %s454
        // Predicated region
        $region29: #{tpu_custom_call.1} parent=23 // pred_check
          %p456 = pneg %p62
        $region30: #{tpu_custom_call.1} parent=23 // pred_check_branch
          %458 = sbr.rel (%p456) target = $region32
        $region31: #{tpu_custom_call.1} parent=23 // pred_region
          %s459 = smul.u32 4, %s18
          %s461 = ssub.s32 1024, 1024
          %462 = vsyncadd %s452, %s461
          %s463 = smul.addr %s459, 2
          %s464 = smul.addr %s463, 128
          %s465 = scalar_lea.hbm %s1, %s464
          %s466 = sshll.u32 %s455, 4
          %s467 = int_to_ptr.vmem [resolvable:$true] %s466
          %472 = dma.vmem_to_hbm [thread:$0]  %s467, 1024, %s465, %s452, 128, 128, 8
        $region32: #{tpu_custom_call.1} parent=23 // pred_fallthru
          _
      $region24: #{tpu_custom_call.1} parent=5 // pred_fallthru
        _
      %p473 = scmp.le.s32.totalorder 2, %s13
      // Predicated region
      $region33: #{tpu_custom_call.1} parent=5 // pred_check
        %p474 = pneg %p473
      $region34: #{tpu_custom_call.1} parent=5 // pred_check_branch
        %476 = sbr.rel (%p474) target = $region36
      $region35: #{tpu_custom_call.1} parent=5 // pred_region
        %s477 = ssub.s32 %s13, 2
        // Predicated region
        $region37: #{tpu_custom_call.1} parent=35 // pred_check
          %p478 = pneg %p68
        $region38: #{tpu_custom_call.1} parent=35 // pred_check_branch
          %480 = sbr.rel (%p478) target = $region40
        $region39: #{tpu_custom_call.1} parent=35 // pred_region
          %s481 = sand.u32 %s53, 1
          %s482 = scalar_lea.sflag [#allocation4], %s481
          %s483 = sand.u32 %s53, 1
          %s484 = smul.addr %s483, 64
          %s485 = scalar_lea.vmem [#allocation5], %s484
          %486 = dma.done %s482, 1024
        $region40: #{tpu_custom_call.1} parent=35 // pred_fallthru
          _
      $region36: #{tpu_custom_call.1} parent=5 // pred_fallthru
        _
    $region6: #{tpu_custom_call.1} parent=1 // loop_footer
      %s17 = sadd.s32 1, %s13
    $region7: #{tpu_custom_call.1} parent=1 // loop_footer_branch
      %12 = sbr.rel target = $region3
    $region8: #{tpu_custom_call.1} parent=1 // loop_exit
      _
    %487 = vsyncpa [#allocation3], 1
    %s488 = scalar_lea.sflag [#allocation3], 1
    %489 = vsyncpa %s488, 1
    %490 = vsyncpa [#allocation4], 1
    %s491 = scalar_lea.sflag [#allocation4], 1
    %492 = vsyncpa %s491, 1

</llo_original>
